<compile_context>
chip_gen: v7x
topology: tpu7x:2x2x1
jax: 0.10.0
libtpu: 0.0.40
codegen_flags: <defaults>
</compile_context>

<pallas_src>
import jax
import jax.numpy as jnp
from jax.experimental import pallas as pl
from jax.experimental.pallas import tpu as pltpu


def _decoder_step_kernel(
    # inputs
    enc_ref,        # (TB, L, Denc)   encoder annotations (resident per batch tile)
    enc_att_ref,    # (TB, L, A)      pre-computed enc @ W_enc_att + b_enc_att
    h0_ref,         # (TB, Ddec)      pre-computed initial hidden state
    c0_ref,         # (TB, Ddec)      pre-computed initial cell state
    x_proj_ref,     # (1, TB, 4*Ddec) emb_t @ W_ih[:E] + b_ih + b_hh (streamed per step)
    w_h_ref,        # (Ddec, A+Denc+4*Ddec)  fused [W_dec_att | W_fbeta | W_hh]
    b_h_ref,        # (1,    A+Denc+4*Ddec)  fused [b_dec_att | b_fbeta | 0]
    w_ctx_ref,      # (Denc, 4*Ddec)  W_ih[E:] (context half of the LSTM input weight)
    w_att_ref,      # (1, A)
    # outputs
    h_out_ref,      # (1, TB, Ddec)
    alpha_out_ref,  # (1, TB, L)
    # scratch (carried across the time axis)
    h_scr,          # (TB, Ddec) f32
    c_scr,          # (TB, Ddec) f32
):
    t = pl.program_id(1)

    @pl.when(t == 0)
    def _init():
        h_scr[...] = h0_ref[...]
        c_scr[...] = c0_ref[...]

    h = h_scr[...]
    c = c_scr[...]

    A = w_att_ref.shape[-1]
    Denc = enc_ref.shape[-1]
    Ddec = h_scr.shape[-1]

    # ---- single fused matmul for all h-driven projections ----
    h_proj = jnp.dot(h, w_h_ref[...], preferred_element_type=jnp.float32) + b_h_ref[...]
    dec_att = h_proj[:, :A]                                   # (TB, A)
    gate = jax.nn.sigmoid(h_proj[:, A:A + Denc])              # (TB, Denc)
    hh_part = h_proj[:, A + Denc:]                            # (TB, 4*Ddec)

    # ---- Bahdanau attention (enc-side projection precomputed) ----
    e = jnp.tanh(enc_att_ref[...] + dec_att[:, None, :])      # (TB, L, A)
    scores = jnp.sum(e * w_att_ref[...].reshape(1, 1, A), axis=-1)   # (TB, L)
    m = jnp.max(scores, axis=-1, keepdims=True)
    ex = jnp.exp(scores - m)
    inv = pl.reciprocal(jnp.sum(ex, axis=-1, keepdims=True), approx=True)
    alpha = ex * inv                                           # (TB, L)

    # context vector as a batched contraction (MXU / reduce path, no big VPU temp)
    z = jnp.einsum('bql,bld->bqd', alpha[:, None, :], enc_ref[...],
                   preferred_element_type=jnp.float32)[:, 0, :]        # (TB, Denc)

    # ---- LSTM cell (embedding-side projection precomputed & streamed) ----
    gated = gate * z
    gates = (x_proj_ref[0] + hh_part
             + jnp.dot(gated, w_ctx_ref[...], preferred_element_type=jnp.float32))
    i_g = jax.nn.sigmoid(gates[:, 0 * Ddec:1 * Ddec])
    f_g = jax.nn.sigmoid(gates[:, 1 * Ddec:2 * Ddec])
    g_g = jnp.tanh(gates[:, 2 * Ddec:3 * Ddec])
    o_g = jax.nn.sigmoid(gates[:, 3 * Ddec:4 * Ddec])
    c_new = f_g * c + i_g * g_g
    h_new = o_g * jnp.tanh(c_new)

    h_scr[...] = h_new
    c_scr[...] = c_new
    h_out_ref[0] = h_new
    alpha_out_ref[0] = alpha


def decoder_forward_pallas(encoder_output, caption, caption_lengths, params,
                           *, batch_block=None):
    B, L, Denc = encoder_output.shape
    T = caption.shape[-1]
    Tm1 = T - 1
    Ddec = params["w_hh"].shape[0]
    V = params["w_fc"].shape[1]
    E = params["embed"].shape[1]
    A = params["w_enc_att"].shape[1]
    TB = B if batch_block is None else batch_block
    assert B % TB == 0
    nb = B // TB

    # -------- glue (sorting, embedding lookup) in plain JAX --------
    sort_ind = jnp.argsort(-caption_lengths)
    enc = encoder_output[sort_ind]
    cap = caption[sort_ind]
    lens = (caption_lengths[sort_ind] - 1).astype(jnp.int32)
    emb = params["embed"][cap[:, :Tm1]]                          # (B, T-1, E)

    # -------- hoisted time-invariant work (big, MXU-friendly matmuls) --------
    enc_att_pre = (jnp.einsum('bld,da->bla', enc, params["w_enc_att"])
                   + params["b_enc_att"])                        # (B, L, A)
    mean = enc.mean(axis=1)
    h0 = jnp.tanh(mean @ params["w_init_h"] + params["b_init_h"])
    c0 = jnp.tanh(mean @ params["w_init_c"] + params["b_init_c"])
    w_ih_emb = params["w_ih"][:E]                                # (E, 4*Ddec)
    w_ih_ctx = params["w_ih"][E:]                                # (Denc, 4*Ddec)
    x_proj = (jnp.einsum('bte,eg->btg', emb, w_ih_emb)
              + params["b_ih"] + params["b_hh"])                 # (B, T-1, 4*Ddec)
    x_proj = jnp.transpose(x_proj, (1, 0, 2))                    # (T-1, B, 4*Ddec)

    # fused h-driven weight: [W_dec_att | W_fbeta | W_hh]
    w_h_fused = jnp.concatenate(
        [params["w_dec_att"], params["w_fbeta"], params["w_hh"]], axis=1)
    b_h_fused = jnp.concatenate(
        [params["b_dec_att"], params["b_fbeta"],
         jnp.zeros((1, 4 * Ddec), jnp.float32)], axis=1)

    G = 4 * Ddec
    F = A + Denc + G

    in_specs = [
        pl.BlockSpec((TB, L, Denc), lambda b, t: (b, 0, 0)),     # enc
        pl.BlockSpec((TB, L, A),    lambda b, t: (b, 0, 0)),     # enc_att_pre
        pl.BlockSpec((TB, Ddec),    lambda b, t: (b, 0)),        # h0
        pl.BlockSpec((TB, Ddec),    lambda b, t: (b, 0)),        # c0
        pl.BlockSpec((1, TB, G),    lambda b, t: (t, b, 0)),     # x_proj (per step)
        pl.BlockSpec((Ddec, F),     lambda b, t: (0, 0)),        # w_h_fused
        pl.BlockSpec((1, F),        lambda b, t: (0, 0)),        # b_h_fused
        pl.BlockSpec((Denc, G),     lambda b, t: (0, 0)),        # w_ih_ctx
        pl.BlockSpec((1, A),        lambda b, t: (0, 0)),        # w_att
    ]
    out_specs = (
        pl.BlockSpec((1, TB, Ddec), lambda b, t: (t, b, 0)),     # h_t
        pl.BlockSpec((1, TB, L),    lambda b, t: (t, b, 0)),     # alpha_t
    )
    out_shape = (
        jax.ShapeDtypeStruct((Tm1, B, Ddec), jnp.float32),
        jax.ShapeDtypeStruct((Tm1, B, L), jnp.float32),
    )

    grid_spec = pltpu.PrefetchScalarGridSpec(
        num_scalar_prefetch=0,
        grid=(nb, Tm1),
        in_specs=in_specs,
        out_specs=out_specs,
        scratch_shapes=[pltpu.VMEM((TB, Ddec), jnp.float32),
                        pltpu.VMEM((TB, Ddec), jnp.float32)],
    )

    hs_tm, alphas_tm = pl.pallas_call(
        _decoder_step_kernel,
        out_shape=out_shape,
        grid_spec=grid_spec,
        compiler_params=pltpu.CompilerParams(
            dimension_semantics=("parallel", "arbitrary")),
    )(enc, enc_att_pre, h0, c0, x_proj, w_h_fused, b_h_fused, w_ih_ctx,
      params["w_att"])

    # -------- vocab projection hoisted out of the recurrent loop --------
    hs = jnp.transpose(hs_tm, (1, 0, 2))                         # (B, T-1, Ddec)
    logits = hs.reshape(B * Tm1, Ddec) @ params["w_fc"] + params["b_fc"]
    preds = logits.reshape(B, Tm1, V)

    # rows whose (length-1) <= t never get written in the PyTorch loop -> zero.
    active = lens[:, None] > jnp.arange(Tm1, dtype=jnp.int32)[None, :]   # (B, T-1)
    predictions = jnp.where(active[:, :, None], preds, 0.0)
    alphas = jnp.where(active[:, :, None], jnp.transpose(alphas_tm, (1, 0, 2)), 0.0)
    return predictions, alphas, cap, lens


# ----------------------- pure-JAX reference -----------------------
def decoder_forward_ref(encoder_output, caption, caption_lengths, params):
    sort_ind = jnp.argsort(-caption_lengths)
    enc = encoder_output[sort_ind]
    cap = caption[sort_ind]
    lens = caption_lengths[sort_ind] - 1
    B, L, Denc = enc.shape
    T = cap.shape[-1]
    Ddec = params["w_hh"].shape[0]
    V = params["w_fc"].shape[1]
    emb_all = params["embed"][cap]

    mean = enc.mean(axis=1)
    h = jnp.tanh(mean @ params["w_init_h"] + params["b_init_h"])
    c = jnp.tanh(mean @ params["w_init_c"] + params["b_init_c"])
    preds = jnp.zeros((B, T - 1, V), jnp.float32)
    alphas = jnp.zeros((B, T - 1, L), jnp.float32)
    for t in range(T - 1):
        active = (lens > t)[:, None]
        enc_att = enc @ params["w_enc_att"] + params["b_enc_att"]
        dec_att = h @ params["w_dec_att"] + params["b_dec_att"]
        e = jnp.tanh(enc_att + dec_att[:, None, :])
        s = jnp.sum(e * params["w_att"].reshape(1, 1, -1), axis=-1) + params["b_att"]
        alpha = jax.nn.softmax(s, axis=1)
        z = jnp.sum(enc * alpha[:, :, None], axis=1)
        gate = jax.nn.sigmoid(h @ params["w_fbeta"] + params["b_fbeta"])
        gated = gate * z
        x = jnp.concatenate([emb_all[:, t, :], gated], axis=1)
        gates = x @ params["w_ih"] + params["b_ih"] + h @ params["w_hh"] + params["b_hh"]
        i_g = jax.nn.sigmoid(gates[:, :Ddec])
        f_g = jax.nn.sigmoid(gates[:, Ddec:2 * Ddec])
        g_g = jnp.tanh(gates[:, 2 * Ddec:3 * Ddec])
        o_g = jax.nn.sigmoid(gates[:, 3 * Ddec:])
        c_new = f_g * c + i_g * g_g
        h_new = o_g * jnp.tanh(c_new)
        pred = h_new @ params["w_fc"] + params["b_fc"]
        preds = preds.at[:, t, :].set(jnp.where(active, pred, 0.0))
        alphas = alphas.at[:, t, :].set(jnp.where(active, alpha, 0.0))
        h = jnp.where(active, h_new, h)
        c = jnp.where(active, c_new, c)
    return preds, alphas, cap, lens


def make_params(key, Denc, Ddec, E, A, V, vocab_size):
    ks = iter(jax.random.split(key, 24))

    def lin(fan_in, fan_out):
        bound = 1.0 / float(fan_in) ** 0.5
        W = jax.random.uniform(next(ks), (fan_in, fan_out), jnp.float32, -bound, bound)
        b = jax.random.uniform(next(ks), (1, fan_out), jnp.float32, -bound, bound)
        return W, b

    p = {}
    p["embed"] = jax.random.uniform(next(ks), (vocab_size, E), jnp.float32, -0.1, 0.1)
    p["w_init_h"], p["b_init_h"] = lin(Denc, Ddec)
    p["w_init_c"], p["b_init_c"] = lin(Denc, Ddec)
    p["w_enc_att"], p["b_enc_att"] = lin(Denc, A)
    p["w_dec_att"], p["b_dec_att"] = lin(Ddec, A)
    bound_a = 1.0 / float(A) ** 0.5
    p["w_att"] = jax.random.uniform(next(ks), (1, A), jnp.float32, -bound_a, bound_a)
    p["b_att"] = jax.random.uniform(next(ks), (1, 1), jnp.float32, -bound_a, bound_a)
    p["w_fbeta"], p["b_fbeta"] = lin(Ddec, Denc)
    p["w_ih"], p["b_ih"] = lin(E + Denc, 4 * Ddec)
    p["w_hh"], p["b_hh"] = lin(Ddec, 4 * Ddec)
    # fc matches Decoder.init_weights: weight uniform(-0.1, 0.1), bias zero.
    p["w_fc"] = jax.random.uniform(next(ks), (Ddec, V), jnp.float32, -0.1, 0.1)
    p["b_fc"] = jnp.zeros((1, V), jnp.float32)
    return p


if __name__ == "__main__":
    B, L = 2, 8                 # batch, number of annotation positions
    Denc, Ddec = 32, 32         # encoder_dim, decoder_dim
    E, A = 16, 16               # embed_size, attention_dim
    V = 50                      # vocab_size
    T = 8                       # max caption length

    key = jax.random.PRNGKey(0)
    kp, ke, kc = jax.random.split(key, 3)
    params = make_params(kp, Denc, Ddec, E, A, V, vocab_size=V)
    encoder_output = jax.random.normal(ke, (B, L, Denc), jnp.float32)
    caption = jax.random.randint(kc, (B, T), 0, V, dtype=jnp.int32)
    caption_lengths = jnp.array([6, 8], dtype=jnp.int32)

    preds, alphas, cap_sorted, lens = decoder_forward_pallas(
        encoder_output, caption, caption_lengths, params)
    jax.block_until_ready((preds, alphas))

    preds_ref, alphas_ref, _, _ = decoder_forward_ref(
        encoder_output, caption, caption_lengths, params)
    # tolerance is looser than pure-f32 because the kernel's softmax uses the
    # EUP approximate reciprocal (pl.reciprocal(..., approx=True)).
    assert jnp.allclose(preds, preds_ref, atol=2e-3, rtol=2e-3), "predictions mismatch"
    assert jnp.allclose(alphas, alphas_ref, atol=2e-3, rtol=2e-3), "alphas mismatch"
    print("KERNEL_OK")
</pallas_src>

<mosaic_0001>
module attributes {stable_mosaic.version = 11 : i64} {
  func.func @_decoder_step_kernel(%arg0: i32, %arg1: i32, %arg2: memref<2x8x32xf32, #tpu.memory_space<vmem>>, %arg3: memref<2x8x16xf32, #tpu.memory_space<vmem>>, %arg4: memref<2x32xf32, #tpu.memory_space<vmem>>, %arg5: memref<2x32xf32, #tpu.memory_space<vmem>>, %arg6: memref<1x2x128xf32, #tpu.memory_space<vmem>>, %arg7: memref<32x176xf32, #tpu.memory_space<vmem>>, %arg8: memref<1x176xf32, #tpu.memory_space<vmem>>, %arg9: memref<32x128xf32, #tpu.memory_space<vmem>>, %arg10: memref<1x16xf32, #tpu.memory_space<vmem>>, %arg11: memref<1x2x32xf32, #tpu.memory_space<vmem>>, %arg12: memref<1x2x8xf32, #tpu.memory_space<vmem>>, %arg13: memref<2x32xf32, #tpu.memory_space<vmem>>, %arg14: memref<2x32xf32, #tpu.memory_space<vmem>>) attributes {dimension_semantics = [#tpu.dimension_semantics<parallel>, #tpu.dimension_semantics<arbitrary>], iteration_bounds = array<i64: 1, 7>, scalar_prefetch = 0 : i64, scratch_operands = 2 : i64, tpu.core_type = #tpu.core_type<tc>, window_params = [{transform_indices = @transform_0, window_bounds = array<i64: 2, 8, 32>}, {transform_indices = @transform_1, window_bounds = array<i64: 2, 8, 16>}, {transform_indices = @transform_2, window_bounds = array<i64: 2, 32>}, {transform_indices = @transform_3, window_bounds = array<i64: 2, 32>}, {transform_indices = @transform_4, window_bounds = array<i64: 1, 2, 128>}, {pipeline_mode = #tpu.pipeline_mode<synchronous>, transform_indices = @transform_5, window_bounds = array<i64: 32, 176>}, {pipeline_mode = #tpu.pipeline_mode<synchronous>, transform_indices = @transform_6, window_bounds = array<i64: 1, 176>}, {pipeline_mode = #tpu.pipeline_mode<synchronous>, transform_indices = @transform_7, window_bounds = array<i64: 32, 128>}, {pipeline_mode = #tpu.pipeline_mode<synchronous>, transform_indices = @transform_8, window_bounds = array<i64: 1, 16>}, {transform_indices = @transform_9, window_bounds = array<i64: 1, 2, 32>}, {transform_indices = @transform_10, window_bounds = array<i64: 1, 2, 8>}]} {
    %c0_i32 = arith.constant 0 : i32
    %0 = arith.cmpi eq, %arg1, %c0_i32 : i32
    %1 = arith.extui %0 : i1 to i32
    %c0_i32_0 = arith.constant 0 : i32
    %2 = arith.cmpi ne, %1, %c0_i32_0 : i32
    scf.if %2 {
      %c0_40 = arith.constant 0 : index
      %c0_41 = arith.constant 0 : index
      %82 = vector.load %arg4[%c0_40, %c0_41] : memref<2x32xf32, #tpu.memory_space<vmem>>, vector<2x32xf32>
      %c0_42 = arith.constant 0 : index
      %c0_43 = arith.constant 0 : index
      %83 = vector.load %arg13[%c0_42, %c0_43] : memref<2x32xf32, #tpu.memory_space<vmem>>, vector<2x32xf32>
      tpu.vector_store %arg13[%c0_42, %c0_43], %82 {strides = array<i32>} : memref<2x32xf32, #tpu.memory_space<vmem>>, vector<2x32xf32>,
      %c0_44 = arith.constant 0 : index
      %c0_45 = arith.constant 0 : index
      %84 = vector.load %arg5[%c0_44, %c0_45] : memref<2x32xf32, #tpu.memory_space<vmem>>, vector<2x32xf32>
      %c0_46 = arith.constant 0 : index
      %c0_47 = arith.constant 0 : index
      %85 = vector.load %arg14[%c0_46, %c0_47] : memref<2x32xf32, #tpu.memory_space<vmem>>, vector<2x32xf32>
      tpu.vector_store %arg14[%c0_46, %c0_47], %84 {strides = array<i32>} : memref<2x32xf32, #tpu.memory_space<vmem>>, vector<2x32xf32>,
    } else {
    }
    %c0 = arith.constant 0 : index
    %c0_1 = arith.constant 0 : index
    %3 = vector.load %arg13[%c0, %c0_1] : memref<2x32xf32, #tpu.memory_space<vmem>>, vector<2x32xf32>
    %c0_2 = arith.constant 0 : index
    %c0_3 = arith.constant 0 : index
    %4 = vector.load %arg14[%c0_2, %c0_3] : memref<2x32xf32, #tpu.memory_space<vmem>>, vector<2x32xf32>
    %c0_4 = arith.constant 0 : index
    %c0_5 = arith.constant 0 : index
    %5 = vector.load %arg7[%c0_4, %c0_5] : memref<32x176xf32, #tpu.memory_space<vmem>>, vector<32x176xf32>
    %cst = arith.constant dense<0.000000e+00> : vector<2x176xf32>
    %6 = tpu.matmul %3, %5, %cst {dimension_numbers = #tpu.dot_dimension_numbers<[1], [0], [0], [1], [0, 0, 1, 1], [], []>} : vector<2x32xf32>, vector<32x176xf32>, vector<2x176xf32> -> vector<2x176xf32>
    %c0_6 = arith.constant 0 : index
    %c0_7 = arith.constant 0 : index
    %7 = vector.load %arg8[%c0_6, %c0_7] : memref<1x176xf32, #tpu.memory_space<vmem>>, vector<1x176xf32>
    %8 = vector.broadcast %7 : vector<1x176xf32> to vector<2x176xf32>
    %9 = arith.addf %6, %8 : vector<2x176xf32>
    %10 = vector.extract_strided_slice %9 {offsets = [0, 0], sizes = [2, 16], strides = [1, 1]} : vector<2x176xf32> to vector<2x16xf32>
    %11 = vector.extract_strided_slice %9 {offsets = [0, 16], sizes = [2, 32], strides = [1, 1]} : vector<2x176xf32> to vector<2x32xf32>
    %12 = arith.negf %11 : vector<2x32xf32>
    %13 = math.exp %12 : vector<2x32xf32>
    %cst_8 = arith.constant 1.000000e+00 : f32
    %14 = vector.broadcast %cst_8 : f32 to vector<2x32xf32>
    %15 = arith.addf %14, %13 : vector<2x32xf32>
    %16 = arith.divf %14, %15 : vector<2x32xf32>
    %17 = vector.extract_strided_slice %9 {offsets = [0, 48], sizes = [2, 128], strides = [1, 1]} : vector<2x176xf32> to vector<2x128xf32>
    %c0_9 = arith.constant 0 : index
    %c0_10 = arith.constant 0 : index
    %c0_11 = arith.constant 0 : index
    %18 = vector.load %arg3[%c0_9, %c0_10, %c0_11] : memref<2x8x16xf32, #tpu.memory_space<vmem>>, vector<2x8x16xf32>
    %19 = vector.shape_cast %10 : vector<2x16xf32> to vector<2x1x16xf32>
    %20 = vector.broadcast %19 : vector<2x1x16xf32> to vector<2x8x16xf32>
    %21 = arith.addf %18, %20 : vector<2x8x16xf32>
    %22 = math.tanh %21 : vector<2x8x16xf32>
    %c0_12 = arith.constant 0 : index
    %c0_13 = arith.constant 0 : index
    %23 = vector.load %arg10[%c0_12, %c0_13] : memref<1x16xf32, #tpu.memory_space<vmem>>, vector<1x16xf32>
    %24 = vector.shape_cast %23 : vector<1x16xf32> to vector<1x1x16xf32>
    %25 = vector.broadcast %24 : vector<1x1x16xf32> to vector<2x8x16xf32>
    %26 = arith.mulf %22, %25 : vector<2x8x16xf32>
    %cst_14 = arith.constant dense<0.000000e+00> : vector<2x8xf32>
    %27 = vector.multi_reduction <add>, %26, %cst_14 [2] : vector<2x8x16xf32> to vector<2x8xf32>
    %cst_15 = arith.constant dense<0xFF800000> : vector<2xf32>
    %28 = vector.multi_reduction <maximumf>, %27, %cst_15 [1] : vector<2x8xf32> to vector<2xf32>
    %29 = vector.shape_cast %28 : vector<2xf32> to vector<2x1xf32>
    %30 = vector.broadcast %29 : vector<2x1xf32> to vector<2x8xf32>
    %31 = arith.subf %27, %30 : vector<2x8xf32>
    %32 = math.exp %31 : vector<2x8xf32>
    %cst_16 = arith.constant dense<0.000000e+00> : vector<2xf32>
    %33 = vector.multi_reduction <add>, %32, %cst_16 [1] : vector<2x8xf32> to vector<2xf32>
    %34 = vector.shape_cast %33 : vector<2xf32> to vector<2x1xf32>
    %35 = tpu.reciprocal %34 {approx = true} : vector<2x1xf32> -> vector<2x1xf32>
    %36 = vector.broadcast %35 : vector<2x1xf32> to vector<2x8xf32>
    %37 = arith.mulf %32, %36 : vector<2x8xf32>
    %38 = vector.shape_cast %37 : vector<2x8xf32> to vector<2x1x8xf32>
    %c0_17 = arith.constant 0 : index
    %c0_18 = arith.constant 0 : index
    %c0_19 = arith.constant 0 : index
    %39 = vector.load %arg2[%c0_17, %c0_18, %c0_19] : memref<2x8x32xf32, #tpu.memory_space<vmem>>, vector<2x8x32xf32>
    "tpu.trace_start"() <{level = 10 : i32, message = "bql,bld->bqd"}> : () -> ()
    %cst_20 = arith.constant dense<0.000000e+00> : vector<2x1x32xf32>
    %40 = tpu.matmul %38, %39, %cst_20 {dimension_numbers = #tpu.dot_dimension_numbers<[2], [1], [1], [2], [0, 0, 0, 1, 1, 2], [0], [0]>} : vector<2x1x8xf32>, vector<2x8x32xf32>, vector<2x1x32xf32> -> vector<2x1x32xf32>
    "tpu.trace_stop"() : () -> ()
    %41 = vector.shape_cast %40 : vector<2x1x32xf32> to vector<2x32xf32>
    %42 = arith.mulf %16, %41 : vector<2x32xf32>
    %c0_21 = arith.constant 0 : index
    %c0_22 = arith.constant 0 : index
    %c0_23 = arith.constant 0 : index
    %43 = vector.load %arg6[%c0_21, %c0_22, %c0_23] : memref<1x2x128xf32, #tpu.memory_space<vmem>>, vector<1x2x128xf32>
    %44 = vector.shape_cast %43 : vector<1x2x128xf32> to vector<2x128xf32>
    %45 = arith.addf %44, %17 : vector<2x128xf32>
    %c0_24 = arith.constant 0 : index
    %c0_25 = arith.constant 0 : index
    %46 = vector.load %arg9[%c0_24, %c0_25] : memref<32x128xf32, #tpu.memory_space<vmem>>, vector<32x128xf32>
    %cst_26 = arith.constant dense<0.000000e+00> : vector<2x128xf32>
    %47 = tpu.matmul %42, %46, %cst_26 {dimension_numbers = #tpu.dot_dimension_numbers<[1], [0], [0], [1], [0, 0, 1, 1], [], []>} : vector<2x32xf32>, vector<32x128xf32>, vector<2x128xf32> -> vector<2x128xf32>
    %48 = arith.addf %45, %47 : vector<2x128xf32>
    %49 = vector.extract_strided_slice %48 {offsets = [0, 0], sizes = [2, 32], strides = [1, 1]} : vector<2x128xf32> to vector<2x32xf32>
    %50 = arith.negf %49 : vector<2x32xf32>
    %51 = math.exp %50 : vector<2x32xf32>
    %cst_27 = arith.constant 1.000000e+00 : f32
    %52 = vector.broadcast %cst_27 : f32 to vector<2x32xf32>
    %53 = arith.addf %52, %51 : vector<2x32xf32>
    %54 = arith.divf %52, %53 : vector<2x32xf32>
    %55 = vector.extract_strided_slice %48 {offsets = [0, 32], sizes = [2, 32], strides = [1, 1]} : vector<2x128xf32> to vector<2x32xf32>
    %56 = arith.negf %55 : vector<2x32xf32>
    %57 = math.exp %56 : vector<2x32xf32>
    %cst_28 = arith.constant 1.000000e+00 : f32
    %58 = vector.broadcast %cst_28 : f32 to vector<2x32xf32>
    %59 = arith.addf %58, %57 : vector<2x32xf32>
    %60 = arith.divf %58, %59 : vector<2x32xf32>
    %61 = vector.extract_strided_slice %48 {offsets = [0, 64], sizes = [2, 32], strides = [1, 1]} : vector<2x128xf32> to vector<2x32xf32>
    %62 = math.tanh %61 : vector<2x32xf32>
    %63 = vector.extract_strided_slice %48 {offsets = [0, 96], sizes = [2, 32], strides = [1, 1]} : vector<2x128xf32> to vector<2x32xf32>
    %64 = arith.negf %63 : vector<2x32xf32>
    %65 = math.exp %64 : vector<2x32xf32>
    %cst_29 = arith.constant 1.000000e+00 : f32
    %66 = vector.broadcast %cst_29 : f32 to vector<2x32xf32>
    %67 = arith.addf %66, %65 : vector<2x32xf32>
    %68 = arith.divf %66, %67 : vector<2x32xf32>
    %69 = arith.mulf %60, %4 : vector<2x32xf32>
    %70 = arith.mulf %54, %62 : vector<2x32xf32>
    %71 = arith.addf %69, %70 : vector<2x32xf32>
    %72 = math.tanh %71 : vector<2x32xf32>
    %73 = arith.mulf %68, %72 : vector<2x32xf32>
    %c0_30 = arith.constant 0 : index
    %c0_31 = arith.constant 0 : index
    %74 = vector.load %arg13[%c0_30, %c0_31] : memref<2x32xf32, #tpu.memory_space<vmem>>, vector<2x32xf32>
    tpu.vector_store %arg13[%c0_30, %c0_31], %73 {strides = array<i32>} : memref<2x32xf32, #tpu.memory_space<vmem>>, vector<2x32xf32>,
    %c0_32 = arith.constant 0 : index
    %c0_33 = arith.constant 0 : index
    %75 = vector.load %arg14[%c0_32, %c0_33] : memref<2x32xf32, #tpu.memory_space<vmem>>, vector<2x32xf32>
    tpu.vector_store %arg14[%c0_32, %c0_33], %71 {strides = array<i32>} : memref<2x32xf32, #tpu.memory_space<vmem>>, vector<2x32xf32>,
    %c0_34 = arith.constant 0 : index
    %c0_35 = arith.constant 0 : index
    %c0_36 = arith.constant 0 : index
    %76 = vector.load %arg11[%c0_34, %c0_35, %c0_36] : memref<1x2x32xf32, #tpu.memory_space<vmem>>, vector<1x2x32xf32>
    %77 = vector.shape_cast %76 : vector<1x2x32xf32> to vector<2x32xf32>
    %78 = vector.shape_cast %73 : vector<2x32xf32> to vector<1x2x32xf32>
    tpu.vector_store %arg11[%c0_34, %c0_35, %c0_36], %78 {strides = array<i32>} : memref<1x2x32xf32, #tpu.memory_space<vmem>>, vector<1x2x32xf32>,
    %c0_37 = arith.constant 0 : index
    %c0_38 = arith.constant 0 : index
    %c0_39 = arith.constant 0 : index
    %79 = vector.load %arg12[%c0_37, %c0_38, %c0_39] : memref<1x2x8xf32, #tpu.memory_space<vmem>>, vector<1x2x8xf32>
    %80 = vector.shape_cast %79 : vector<1x2x8xf32> to vector<2x8xf32>
    %81 = vector.shape_cast %37 : vector<2x8xf32> to vector<1x2x8xf32>
    tpu.vector_store %arg12[%c0_37, %c0_38, %c0_39], %81 {strides = array<i32>} : memref<1x2x8xf32, #tpu.memory_space<vmem>>, vector<1x2x8xf32>,
    return
  }
  func.func @transform_0(%arg0: i32, %arg1: i32) -> (i32, i32, i32) {
    %c0_i32 = arith.constant 0 : i32
    %c0_i32_0 = arith.constant 0 : i32
    %c0_i32_1 = arith.constant 0 : i32
    return %arg0, %c0_i32, %c0_i32_0 : i32, i32, i32
  }
  func.func @transform_1(%arg0: i32, %arg1: i32) -> (i32, i32, i32) {
    %c0_i32 = arith.constant 0 : i32
    %c0_i32_0 = arith.constant 0 : i32
    %c0_i32_1 = arith.constant 0 : i32
    return %arg0, %c0_i32, %c0_i32_0 : i32, i32, i32
  }
  func.func @transform_2(%arg0: i32, %arg1: i32) -> (i32, i32) {
    %c0_i32 = arith.constant 0 : i32
    %c0_i32_0 = arith.constant 0 : i32
    return %arg0, %c0_i32 : i32, i32
  }
  func.func @transform_3(%arg0: i32, %arg1: i32) -> (i32, i32) {
    %c0_i32 = arith.constant 0 : i32
    %c0_i32_0 = arith.constant 0 : i32
    return %arg0, %c0_i32 : i32, i32
  }
  func.func @transform_4(%arg0: i32, %arg1: i32) -> (i32, i32, i32) {
    %c0_i32 = arith.constant 0 : i32
    %c0_i32_0 = arith.constant 0 : i32
    return %arg1, %arg0, %c0_i32 : i32, i32, i32
  }
  func.func @transform_5(%arg0: i32, %arg1: i32) -> (i32, i32) {
    %c0_i32 = arith.constant 0 : i32
    %c0_i32_0 = arith.constant 0 : i32
    %c0_i32_1 = arith.constant 0 : i32
    return %c0_i32, %c0_i32_0 : i32, i32
  }
  func.func @transform_6(%arg0: i32, %arg1: i32) -> (i32, i32) {
    %c0_i32 = arith.constant 0 : i32
    %c0_i32_0 = arith.constant 0 : i32
    %c0_i32_1 = arith.constant 0 : i32
    return %c0_i32, %c0_i32_0 : i32, i32
  }
  func.func @transform_7(%arg0: i32, %arg1: i32) -> (i32, i32) {
    %c0_i32 = arith.constant 0 : i32
    %c0_i32_0 = arith.constant 0 : i32
    %c0_i32_1 = arith.constant 0 : i32
    return %c0_i32, %c0_i32_0 : i32, i32
  }
  func.func @transform_8(%arg0: i32, %arg1: i32) -> (i32, i32) {
    %c0_i32 = arith.constant 0 : i32
    %c0_i32_0 = arith.constant 0 : i32
    %c0_i32_1 = arith.constant 0 : i32
    return %c0_i32, %c0_i32_0 : i32, i32
  }
  func.func @transform_9(%arg0: i32, %arg1: i32) -> (i32, i32, i32) {
    %c0_i32 = arith.constant 0 : i32
    %c0_i32_0 = arith.constant 0 : i32
    return %arg1, %arg0, %c0_i32 : i32, i32, i32
  }
  func.func @transform_10(%arg0: i32, %arg1: i32) -> (i32, i32, i32) {
    %c0_i32 = arith.constant 0 : i32
    %c0_i32_0 = arith.constant 0 : i32
    return %arg1, %arg0, %c0_i32 : i32, i32, i32
  }
}

</mosaic_0001>

<llo_original>
// kernel: tpu_custom_call.1
$region0: #{tpu_custom_call.1}
  #allocation0 [shape = 'u32[]', space=smem, size = 0x4, offset = 0x4, fixed_abs, tag = 'smem constant byte address 0x4 - core index']
  #allocation1 [shape = 'u32[144,128]{1,0:T(1,128)}', space=vmem, size = 0x12000, scoped, tag = 'internal scratch']
  #allocation2 [shape = 'f32[2,32]{1,0:T(2,128)}', space=vmem, size = 0x400, scoped, tag = 'scratch operand']
  #allocation3 [shape = 'f32[2,32]{1,0:T(2,128)}', space=vmem, size = 0x400, scoped, tag = 'scratch operand']
  %s0 = inlined_call_operand.hbm [shape: f32[2,8,32], index: 0, kind: input, shape index: {}]
  %s1 = inlined_call_operand.hbm [shape: f32[2,8,16], index: 1, kind: input, shape index: {}]
  %s2 = inlined_call_operand.hbm [shape: f32[2,32], index: 2, kind: input, shape index: {}]
  %s3 = inlined_call_operand.hbm [shape: f32[2,32], index: 3, kind: input, shape index: {}]
  %s4 = inlined_call_operand.vmem [shape: f32[7,2,128], index: 4, kind: input, shape index: {}]
  %s5 = inlined_call_operand.hbm [shape: f32[32,176], index: 5, kind: input, shape index: {}]
  %s6 = inlined_call_operand.vmem [shape: f32[1,176], index: 6, kind: input, shape index: {}]
  %s7 = inlined_call_operand.hbm [shape: f32[32,128], index: 7, kind: input, shape index: {}]
  %s8 = inlined_call_operand.vmem [shape: f32[1,16], index: 8, kind: input, shape index: {}]
  %s9 = inlined_call_operand.hbm [shape: f32[7,2,32], index: 9, kind: output, shape index: {0}]
  %s10 = inlined_call_operand.hbm [shape: f32[7,2,8], index: 10, kind: output, shape index: {1}]
  %11 = xla_tuple %s9, %s10
  %s12 = sld [smem:[#allocation0]]
  $region105: #{tpu_custom_call.1} parent=0
    _
  %s14 = ssub.s32 1, %s12
  %s15 = scalar_select 0, %s14, %s12
  $region1: #{tpu_custom_call.1} parent=0
    #allocation4 [shape = 'u8[8192]{0}', space=vmem, size = 0x2000, scoped, tag = 'input window, operand 0, single buffered']
    #allocation5 [shape = 's32[2]{0}', space=sflag, size = 0x8, scoped, tag = 'scoped memory for tpu_custom_call.1']
    #allocation6 [shape = 's32[2]{0}', space=sflag, size = 0x8, scoped, tag = 'scoped memory for tpu_custom_call.1']
    #allocation7 [shape = 'u8[8192]{0}', space=vmem, size = 0x2000, scoped, tag = 'input window, operand 1, single buffered']
    #allocation8 [shape = 's32[1]{0}', space=sflag, size = 0x4, scoped, tag = 'scoped memory for tpu_custom_call.1']
    #allocation9 [shape = 'u8[1024]{0}', space=vmem, size = 0x400, scoped, tag = 'input window, operand 2, single buffered']
    #allocation10 [shape = 'u8[1024]{0}', space=vmem, size = 0x400, scoped, tag = 'input window, operand 3, single buffered']
    #allocation11 [shape = 's32[1]{0}', space=sflag, size = 0x4, scoped, tag = 'scoped memory for tpu_custom_call.1']
    #allocation12 [shape = 'u8[32768]{0}', space=vmem, size = 0x8000, scoped, tag = 'input window, operand 5, single buffered']
    #allocation13 [shape = 'u8[16384]{0}', space=vmem, size = 0x4000, scoped, tag = 'input window, operand 7, single buffered']
    #allocation14 [shape = 's32[1]{0}', space=sflag, size = 0x4, scoped, tag = 'scoped memory for tpu_custom_call.1']
    #allocation15 [shape = 'u8[2048]{0}', space=vmem, size = 0x800, scoped, tag = 'output window, operand 0']
    #allocation16 [shape = 'u8[2048]{0}', space=vmem, size = 0x800, scoped, tag = 'output window, operand 1']
    #allocation17 [shape = 's32[2]{0}', space=sflag, size = 0x8, scoped, tag = 'scoped memory for tpu_custom_call.1']
    %16 = vsyncpa [#allocation5], 0
    %17 = vsyncpa [#allocation8], 0
    %18 = vsyncpa [#allocation11], 0
    %19 = vsyncpa [#allocation14], 0
    %20 = vsyncpa [#allocation6], 0
    %s21 = scalar_lea.sflag [#allocation6], 1
    %22 = vsyncpa %s21, 0
    %23 = vsyncpa [#allocation17], 0
    %s24 = scalar_lea.sflag [#allocation17], 1
    %25 = vsyncpa %s24, 0
    loop: start=0, step=1, limit=9
    $region2: #{tpu_custom_call.1} parent=1 // loop_pre_header
      _
    $region3: #{tpu_custom_call.1} parent=1 // loop_header
      %s27 = sphi 0, %s31
      %p28 = scmp.ge.s32.totalorder %s27, 9
      %s34 = sphi 0, %s46
      %s35 = sphi 0, %s42
      %s36 = sphi 0, %s34
      %s37 = sphi 0, %s35
      %s38 = sphi 0, %s36
      %s39 = sphi 0, %s37
      %s49 = sphi 0, %s51
      %s52 = sphi 0, %s49
      %s53 = sphi 0, %s52
      %s69 = sphi 0, %s53
      %s75 = sphi 0, %s77
      %s78 = sphi 0, %s75
      %s79 = sphi 0, %s78
      %s95 = sphi 0, %s79
      %s101 = sphi 0, %s103
      %s104 = sphi 0, %s101
      %s105 = sphi 0, %s104
      %s121 = sphi 0, %s105
      %s127 = sphi 0, %s129
      %s130 = sphi 0, %s127
      %s131 = sphi 0, %s130
      %s147 = sphi 0, %s131
      %s155 = sphi 0, %s157
      %s158 = sphi 0, %s155
      %s159 = sphi 0, %s158
      %s175 = sphi 0, %s159
      %s179 = sphi 0, %s179
      %s181 = sphi 0, %s179
      %s182 = sphi 0, %s181
      %s196 = sphi 0, %s182
      %s200 = sphi 0, %s200
      %s202 = sphi 0, %s200
      %s203 = sphi 0, %s202
      %s217 = sphi 0, %s203
      %s221 = sphi 0, %s221
      %s223 = sphi 0, %s221
      %s224 = sphi 0, %s223
      %s238 = sphi 0, %s224
      %s242 = sphi 0, %s242
      %s244 = sphi 0, %s242
      %s245 = sphi 0, %s244
      %s259 = sphi 0, %s245
      %s267 = sphi 0, %s269
      %s270 = sphi 0, %s267
      %s271 = sphi 0, %s270
      %s287 = sphi 0, %s271
      %s295 = sphi 0, %s297
      %s298 = sphi 0, %s295
      %s299 = sphi 0, %s298
      %s315 = sphi 0, %s299
    $region4: #{tpu_custom_call.1} parent=1 // loop_header_branch
      %30 = sbr.rel (%p28) target = $region8
    $region5: #{tpu_custom_call.1} parent=1 // loop_body
      %s32 = ssub.s32 %s27, 1
      %s33 = ssub.s32 %s27, 2
      %s40 = sadd.s32 1, %s35
      %p41 = scmp.ge.s32.totalorder %s40, 7
      %s42 = scalar_select %p41, 0, %s40
      %s43 = sadd.s32 1, %s34
      %s44 = scalar_select %p41, %s43, %s34
      %p45 = scmp.ge.s32.totalorder %s44, 1
      %s46 = scalar_select %p45, 0, %s44
      %s47 = ssub.s32 %s34, %s46
      %p48 = scmp.eq.s32.totalorder %s47, 0
      %s50 = sadd.s32 %s49, 1
      %s51 = scalar_select %p48, %s49, %s50
      %p54 = pneg %p48
      %p55 = scmp.eq.s32.totalorder %s27, 6
      %p56 = por %p54, %p55
      %p57 = scmp.ne.s32.totalorder %s49, %s52
      %p58 = scmp.eq.s32.totalorder %s27, 0
      %p59 = por %p57, %p58
      %p60 = scmp.ne.s32.totalorder %s49, %s52
      %p61 = scmp.eq.s32.totalorder %s32, 6
      %p62 = por %p60, %p61
      %p63 = scmp.ne.s32.totalorder %s52, %s53
      %p64 = scmp.eq.s32.totalorder %s32, 0
      %p65 = por %p63, %p64
      %p66 = scmp.ne.s32.totalorder %s52, %s53
      %p67 = scmp.eq.s32.totalorder %s33, 6
      %p68 = por %p66, %p67
      %p70 = scmp.ne.s32.totalorder %s53, %s69
      %p71 = scmp.eq.s32.totalorder %s33, 0
      %p72 = por %p70, %p71
      %s73 = ssub.s32 %s34, %s46
      %p74 = scmp.eq.s32.totalorder %s73, 0
      %s76 = sadd.s32 %s75, 1
      %s77 = scalar_select %p74, %s75, %s76
      %p80 = pneg %p74
      %p81 = scmp.eq.s32.totalorder %s27, 6
      %p82 = por %p80, %p81
      %p83 = scmp.ne.s32.totalorder %s75, %s78
      %p84 = scmp.eq.s32.totalorder %s27, 0
      %p85 = por %p83, %p84
      %p86 = scmp.ne.s32.totalorder %s75, %s78
      %p87 = scmp.eq.s32.totalorder %s32, 6
      %p88 = por %p86, %p87
      %p89 = scmp.ne.s32.totalorder %s78, %s79
      %p90 = scmp.eq.s32.totalorder %s32, 0
      %p91 = por %p89, %p90
      %p92 = scmp.ne.s32.totalorder %s78, %s79
      %p93 = scmp.eq.s32.totalorder %s33, 6
      %p94 = por %p92, %p93
      %p96 = scmp.ne.s32.totalorder %s79, %s95
      %p97 = scmp.eq.s32.totalorder %s33, 0
      %p98 = por %p96, %p97
      %s99 = ssub.s32 %s34, %s46
      %p100 = scmp.eq.s32.totalorder %s99, 0
      %s102 = sadd.s32 %s101, 1
      %s103 = scalar_select %p100, %s101, %s102
      %p106 = pneg %p100
      %p107 = scmp.eq.s32.totalorder %s27, 6
      %p108 = por %p106, %p107
      %p109 = scmp.ne.s32.totalorder %s101, %s104
      %p110 = scmp.eq.s32.totalorder %s27, 0
      %p111 = por %p109, %p110
      %p112 = scmp.ne.s32.totalorder %s101, %s104
      %p113 = scmp.eq.s32.totalorder %s32, 6
      %p114 = por %p112, %p113
      %p115 = scmp.ne.s32.totalorder %s104, %s105
      %p116 = scmp.eq.s32.totalorder %s32, 0
      %p117 = por %p115, %p116
      %p118 = scmp.ne.s32.totalorder %s104, %s105
      %p119 = scmp.eq.s32.totalorder %s33, 6
      %p120 = por %p118, %p119
      %p122 = scmp.ne.s32.totalorder %s105, %s121
      %p123 = scmp.eq.s32.totalorder %s33, 0
      %p124 = por %p122, %p123
      %s125 = ssub.s32 %s34, %s46
      %p126 = scmp.eq.s32.totalorder %s125, 0
      %s128 = sadd.s32 %s127, 1
      %s129 = scalar_select %p126, %s127, %s128
      %p132 = pneg %p126
      %p133 = scmp.eq.s32.totalorder %s27, 6
      %p134 = por %p132, %p133
      %p135 = scmp.ne.s32.totalorder %s127, %s130
      %p136 = scmp.eq.s32.totalorder %s27, 0
      %p137 = por %p135, %p136
      %p138 = scmp.ne.s32.totalorder %s127, %s130
      %p139 = scmp.eq.s32.totalorder %s32, 6
      %p140 = por %p138, %p139
      %p141 = scmp.ne.s32.totalorder %s130, %s131
      %p142 = scmp.eq.s32.totalorder %s32, 0
      %p143 = por %p141, %p142
      %p144 = scmp.ne.s32.totalorder %s130, %s131
      %p145 = scmp.eq.s32.totalorder %s33, 6
      %p146 = por %p144, %p145
      %p148 = scmp.ne.s32.totalorder %s131, %s147
      %p149 = scmp.eq.s32.totalorder %s33, 0
      %p150 = por %p148, %p149
      %s151 = ssub.s32 %s35, %s42
      %s152 = ssub.s32 %s34, %s46
      %s153 = sor.u32 %s151, %s152
      %p154 = scmp.eq.s32.totalorder %s153, 0
      %s156 = sadd.s32 %s155, 1
      %s157 = scalar_select %p154, %s155, %s156
      %p160 = pneg %p154
      %p161 = scmp.eq.s32.totalorder %s27, 6
      %p162 = por %p160, %p161
      %p163 = scmp.ne.s32.totalorder %s155, %s158
      %p164 = scmp.eq.s32.totalorder %s27, 0
      %p165 = por %p163, %p164
      %p166 = scmp.ne.s32.totalorder %s155, %s158
      %p167 = scmp.eq.s32.totalorder %s32, 6
      %p168 = por %p166, %p167
      %p169 = scmp.ne.s32.totalorder %s158, %s159
      %p170 = scmp.eq.s32.totalorder %s32, 0
      %p171 = por %p169, %p170
      %p172 = scmp.ne.s32.totalorder %s158, %s159
      %p173 = scmp.eq.s32.totalorder %s33, 6
      %p174 = por %p172, %p173
      %p176 = scmp.ne.s32.totalorder %s159, %s175
      %p177 = scmp.eq.s32.totalorder %s33, 0
      %p178 = por %p176, %p177
      %s180 = sadd.s32 %s179, 1
      %p183 = scmp.eq.s32.totalorder %s27, 6
      %p184 = scmp.ne.s32.totalorder %s179, %s181
      %p185 = scmp.eq.s32.totalorder %s27, 0
      %p186 = por %p184, %p185
      %p187 = scmp.ne.s32.totalorder %s179, %s181
      %p188 = scmp.eq.s32.totalorder %s32, 6
      %p189 = por %p187, %p188
      %p190 = scmp.ne.s32.totalorder %s181, %s182
      %p191 = scmp.eq.s32.totalorder %s32, 0
      %p192 = por %p190, %p191
      %p193 = scmp.ne.s32.totalorder %s181, %s182
      %p194 = scmp.eq.s32.totalorder %s33, 6
      %p195 = por %p193, %p194
      %p197 = scmp.ne.s32.totalorder %s182, %s196
      %p198 = scmp.eq.s32.totalorder %s33, 0
      %p199 = por %p197, %p198
      %s201 = sadd.s32 %s200, 1
      %p204 = scmp.eq.s32.totalorder %s27, 6
      %p205 = scmp.ne.s32.totalorder %s200, %s202
      %p206 = scmp.eq.s32.totalorder %s27, 0
      %p207 = por %p205, %p206
      %p208 = scmp.ne.s32.totalorder %s200, %s202
      %p209 = scmp.eq.s32.totalorder %s32, 6
      %p210 = por %p208, %p209
      %p211 = scmp.ne.s32.totalorder %s202, %s203
      %p212 = scmp.eq.s32.totalorder %s32, 0
      %p213 = por %p211, %p212
      %p214 = scmp.ne.s32.totalorder %s202, %s203
      %p215 = scmp.eq.s32.totalorder %s33, 6
      %p216 = por %p214, %p215
      %p218 = scmp.ne.s32.totalorder %s203, %s217
      %p219 = scmp.eq.s32.totalorder %s33, 0
      %p220 = por %p218, %p219
      %s222 = sadd.s32 %s221, 1
      %p225 = scmp.eq.s32.totalorder %s27, 6
      %p226 = scmp.ne.s32.totalorder %s221, %s223
      %p227 = scmp.eq.s32.totalorder %s27, 0
      %p228 = por %p226, %p227
      %p229 = scmp.ne.s32.totalorder %s221, %s223
      %p230 = scmp.eq.s32.totalorder %s32, 6
      %p231 = por %p229, %p230
      %p232 = scmp.ne.s32.totalorder %s223, %s224
      %p233 = scmp.eq.s32.totalorder %s32, 0
      %p234 = por %p232, %p233
      %p235 = scmp.ne.s32.totalorder %s223, %s224
      %p236 = scmp.eq.s32.totalorder %s33, 6
      %p237 = por %p235, %p236
      %p239 = scmp.ne.s32.totalorder %s224, %s238
      %p240 = scmp.eq.s32.totalorder %s33, 0
      %p241 = por %p239, %p240
      %s243 = sadd.s32 %s242, 1
      %p246 = scmp.eq.s32.totalorder %s27, 6
      %p247 = scmp.ne.s32.totalorder %s242, %s244
      %p248 = scmp.eq.s32.totalorder %s27, 0
      %p249 = por %p247, %p248
      %p250 = scmp.ne.s32.totalorder %s242, %s244
      %p251 = scmp.eq.s32.totalorder %s32, 6
      %p252 = por %p250, %p251
      %p253 = scmp.ne.s32.totalorder %s244, %s245
      %p254 = scmp.eq.s32.totalorder %s32, 0
      %p255 = por %p253, %p254
      %p256 = scmp.ne.s32.totalorder %s244, %s245
      %p257 = scmp.eq.s32.totalorder %s33, 6
      %p258 = por %p256, %p257
      %p260 = scmp.ne.s32.totalorder %s245, %s259
      %p261 = scmp.eq.s32.totalorder %s33, 0
      %p262 = por %p260, %p261
      %s263 = ssub.s32 %s35, %s42
      %s264 = ssub.s32 %s34, %s46
      %s265 = sor.u32 %s263, %s264
      %p266 = scmp.eq.s32.totalorder %s265, 0
      %s268 = sadd.s32 %s267, 1
      %s269 = scalar_select %p266, %s267, %s268
      %p272 = pneg %p266
      %p273 = scmp.eq.s32.totalorder %s27, 6
      %p274 = por %p272, %p273
      %p275 = scmp.ne.s32.totalorder %s267, %s270
      %p276 = scmp.eq.s32.totalorder %s27, 0
      %p277 = por %p275, %p276
      %p278 = scmp.ne.s32.totalorder %s267, %s270
      %p279 = scmp.eq.s32.totalorder %s32, 6
      %p280 = por %p278, %p279
      %p281 = scmp.ne.s32.totalorder %s270, %s271
      %p282 = scmp.eq.s32.totalorder %s32, 0
      %p283 = por %p281, %p282
      %p284 = scmp.ne.s32.totalorder %s270, %s271
      %p285 = scmp.eq.s32.totalorder %s33, 6
      %p286 = por %p284, %p285
      %p288 = scmp.ne.s32.totalorder %s271, %s287
      %p289 = scmp.eq.s32.totalorder %s33, 0
      %p290 = por %p288, %p289
      %s291 = ssub.s32 %s35, %s42
      %s292 = ssub.s32 %s34, %s46
      %s293 = sor.u32 %s291, %s292
      %p294 = scmp.eq.s32.totalorder %s293, 0
      %s296 = sadd.s32 %s295, 1
      %s297 = scalar_select %p294, %s295, %s296
      %p300 = pneg %p294
      %p301 = scmp.eq.s32.totalorder %s27, 6
      %p302 = por %p300, %p301
      %p303 = scmp.ne.s32.totalorder %s295, %s298
      %p304 = scmp.eq.s32.totalorder %s27, 0
      %p305 = por %p303, %p304
      %p306 = scmp.ne.s32.totalorder %s295, %s298
      %p307 = scmp.eq.s32.totalorder %s32, 6
      %p308 = por %p306, %p307
      %p309 = scmp.ne.s32.totalorder %s298, %s299
      %p310 = scmp.eq.s32.totalorder %s32, 0
      %p311 = por %p309, %p310
      %p312 = scmp.ne.s32.totalorder %s298, %s299
      %p313 = scmp.eq.s32.totalorder %s33, 6
      %p314 = por %p312, %p313
      %p316 = scmp.ne.s32.totalorder %s299, %s315
      %p317 = scmp.eq.s32.totalorder %s33, 0
      %p318 = por %p316, %p317
      %p319 = scmp.le.s32.totalorder 1, %s27
      %p320 = scmp.lt.s32.totalorder %s27, 8
      %p321 = pnand %p319, %p320
      %p322 = pneg %p321
      // Predicated region
      $region9: #{tpu_custom_call.1} parent=5 // pred_check
        _
      $region10: #{tpu_custom_call.1} parent=5 // pred_check_branch
        %324 = sbr.rel (%p321) target = $region12
      $region11: #{tpu_custom_call.1} parent=5 // pred_region
        %s325 = ssub.s32 %s27, 1
        // Predicated region
        $region13: #{tpu_custom_call.1} parent=11 // pred_check
          %p326 = pneg %p65
        $region14: #{tpu_custom_call.1} parent=11 // pred_check_branch
          %328 = sbr.rel (%p326) target = $region16
        $region15: #{tpu_custom_call.1} parent=11 // pred_region
          %s329 = smul.u32 2, %s36
          %s331 = ssub.s32 256, 256
          %332 = vsyncadd [#allocation5], %s331
          %s333 = smul.addr %s329, 128
          %s334 = scalar_lea.hbm %s0, %s333
          %s335 = sshll.u32 [#allocation4], 4
          %s336 = int_to_ptr.vmem [resolvable:$true] %s335
          %341 = dma.hbm_to_vmem [thread:$0]  %s334, 256, %s336, [#allocation5], 128, 128, 8
        $region16: #{tpu_custom_call.1} parent=11 // pred_fallthru
          _
        // Predicated region
        $region17: #{tpu_custom_call.1} parent=11 // pred_check
          %p342 = pneg %p91
        $region18: #{tpu_custom_call.1} parent=11 // pred_check_branch
          %344 = sbr.rel (%p342) target = $region20
        $region19: #{tpu_custom_call.1} parent=11 // pred_region
          %s345 = smul.u32 2, %s36
          %s347 = ssub.s32 256, 256
          %348 = vsyncadd [#allocation8], %s347
          %s349 = smul.addr %s345, 128
          %s350 = scalar_lea.hbm %s1, %s349
          %s351 = sshll.u32 [#allocation7], 4
          %s352 = int_to_ptr.vmem [resolvable:$true] %s351
          %357 = dma.hbm_to_vmem [thread:$0]  %s350, 256, %s352, [#allocation8], 128, 128, 8
        $region20: #{tpu_custom_call.1} parent=11 // pred_fallthru
          _
        // Predicated region
        $region21: #{tpu_custom_call.1} parent=11 // pred_check
          %p358 = pneg %p117
        $region22: #{tpu_custom_call.1} parent=11 // pred_check_branch
          %360 = sbr.rel (%p358) target = $region24
        $region23: #{tpu_custom_call.1} parent=11 // pred_region
          %s362 = ssub.s32 32, 32
          %363 = vsyncadd [#allocation8], %s362
          %s364 = smul.addr %s36, 32
          %s365 = scalar_lea.hbm %s2, %s364
          %s367 = sshll.u32 [#allocation9], 4
          %s368 = int_to_ptr.vmem [resolvable:$true] %s367
          %370 = dma.hbm_to_vmem [thread:$0]  %s365, 32, %s368, [#allocation8]
        $region24: #{tpu_custom_call.1} parent=11 // pred_fallthru
          _
        // Predicated region
        $region25: #{tpu_custom_call.1} parent=11 // pred_check
          %p371 = pneg %p143
        $region26: #{tpu_custom_call.1} parent=11 // pred_check_branch
          %373 = sbr.rel (%p371) target = $region28
        $region27: #{tpu_custom_call.1} parent=11 // pred_region
          %s375 = ssub.s32 32, 32
          %376 = vsyncadd [#allocation11], %s375
          %s377 = smul.addr %s36, 32
          %s378 = scalar_lea.hbm %s3, %s377
          %s380 = sshll.u32 [#allocation10], 4
          %s381 = int_to_ptr.vmem [resolvable:$true] %s380
          %383 = dma.hbm_to_vmem [thread:$0]  %s378, 32, %s381, [#allocation11]
        $region28: #{tpu_custom_call.1} parent=11 // pred_fallthru
          _
        // Predicated region
        $region29: #{tpu_custom_call.1} parent=11 // pred_check
          %p384 = pneg %p192
        $region30: #{tpu_custom_call.1} parent=11 // pred_check_branch
          %386 = sbr.rel (%p384) target = $region32
        $region31: #{tpu_custom_call.1} parent=11 // pred_region
          %s388 = ssub.s32 1024, 1024
          %389 = vsyncadd [#allocation11], %s388
          %s390 = sshll.u32 [#allocation12], 4
          %s391 = int_to_ptr.vmem [resolvable:$true] %s390
          %396 = dma.hbm_to_vmem [thread:$0]  %s5, 1024, %s391, [#allocation11], 256, 256, 16
        $region32: #{tpu_custom_call.1} parent=11 // pred_fallthru
          _
        // Predicated region
        $region33: #{tpu_custom_call.1} parent=11 // pred_check
          %p397 = pneg %p213
        $region34: #{tpu_custom_call.1} parent=11 // pred_check_branch
          %399 = sbr.rel (%p397) target = $region36
        $region35: #{tpu_custom_call.1} parent=11 // pred_region
          _
        $region36: #{tpu_custom_call.1} parent=11 // pred_fallthru
          _
        // Predicated region
        $region37: #{tpu_custom_call.1} parent=11 // pred_check
          %p400 = pneg %p234
        $region38: #{tpu_custom_call.1} parent=11 // pred_check_branch
          %402 = sbr.rel (%p400) target = $region40
        $region39: #{tpu_custom_call.1} parent=11 // pred_region
          %s404 = ssub.s32 512, 512
          %405 = vsyncadd [#allocation14], %s404
          %s406 = sshll.u32 [#allocation13], 4
          %s407 = int_to_ptr.vmem [resolvable:$true] %s406
          %412 = dma.hbm_to_vmem [thread:$0]  %s7, 512, %s407, [#allocation14], 128, 128, 8
        $region40: #{tpu_custom_call.1} parent=11 // pred_fallthru
          _
        // Predicated region
        $region41: #{tpu_custom_call.1} parent=11 // pred_check
          %p413 = pneg %p255
        $region42: #{tpu_custom_call.1} parent=11 // pred_check_branch
          %415 = sbr.rel (%p413) target = $region44
        $region43: #{tpu_custom_call.1} parent=11 // pred_region
          _
        $region44: #{tpu_custom_call.1} parent=11 // pred_fallthru
          _
      $region12: #{tpu_custom_call.1} parent=5 // pred_fallthru
        _
      %p416 = scmp.lt.s32.totalorder %s27, 7
      // Predicated region
      $region45: #{tpu_custom_call.1} parent=5 // pred_check
        %p417 = pneg %p416
      $region46: #{tpu_custom_call.1} parent=5 // pred_check_branch
        %419 = sbr.rel (%p417) target = $region48
      $region47: #{tpu_custom_call.1} parent=5 // pred_region
        // Predicated region
        $region49: #{tpu_custom_call.1} parent=47 // pred_check
          %p420 = pneg %p165
        $region50: #{tpu_custom_call.1} parent=47 // pred_check_branch
          %422 = sbr.rel (%p420) target = $region52
        $region51: #{tpu_custom_call.1} parent=47 // pred_region
          %p423 = scmp.lt.s32.totalorder %s35, 6
          %s424 = scalar_select %p423, %s35, 6
          %p425 = scmp.lt.s32.totalorder %s34, 0
          %s426 = scalar_select %p425, %s34, 0
          %s427 = sadd.s32 %s426, %s424
          %s428 = smul.addr %s427, 2
          %s429 = scalar_lea.vmem %s4, %s428
        $region52: #{tpu_custom_call.1} parent=47 // pred_fallthru
          _
      $region48: #{tpu_custom_call.1} parent=5 // pred_fallthru
        _
      %p430 = scmp.le.s32.totalorder 1, %s27
      %p431 = scmp.lt.s32.totalorder %s27, 8
      %p432 = pnand %p430, %p431
      %p433 = pneg %p432
      // Predicated region
      $region53: #{tpu_custom_call.1} parent=5 // pred_check
        _
      $region54: #{tpu_custom_call.1} parent=5 // pred_check_branch
        %435 = sbr.rel (%p432) target = $region56
      $region55: #{tpu_custom_call.1} parent=5 // pred_region
        %s436 = ssub.s32 %s27, 1
        // Predicated region
        $region57: #{tpu_custom_call.1} parent=55 // pred_check
          %p437 = pneg %p65
        $region58: #{tpu_custom_call.1} parent=55 // pred_check_branch
          %439 = sbr.rel (%p437) target = $region60
        $region59: #{tpu_custom_call.1} parent=55 // pred_region
          %440 = dma.done [#allocation5], 256
        $region60: #{tpu_custom_call.1} parent=55 // pred_fallthru
          _
        // Predicated region
        $region61: #{tpu_custom_call.1} parent=55 // pred_check
          %p441 = pneg %p91
        $region62: #{tpu_custom_call.1} parent=55 // pred_check_branch
          %443 = sbr.rel (%p441) target = $region64
        $region63: #{tpu_custom_call.1} parent=55 // pred_region
          %444 = dma.done [#allocation8], 256
        $region64: #{tpu_custom_call.1} parent=55 // pred_fallthru
          _
        // Predicated region
        $region65: #{tpu_custom_call.1} parent=55 // pred_check
          %p445 = pneg %p117
        $region66: #{tpu_custom_call.1} parent=55 // pred_check_branch
          %447 = sbr.rel (%p445) target = $region68
        $region67: #{tpu_custom_call.1} parent=55 // pred_region
          %448 = dma.done [#allocation8], 32
        $region68: #{tpu_custom_call.1} parent=55 // pred_fallthru
          _
        // Predicated region
        $region69: #{tpu_custom_call.1} parent=55 // pred_check
          %p449 = pneg %p143
        $region70: #{tpu_custom_call.1} parent=55 // pred_check_branch
          %451 = sbr.rel (%p449) target = $region72
        $region71: #{tpu_custom_call.1} parent=55 // pred_region
          %452 = dma.done [#allocation11], 32
        $region72: #{tpu_custom_call.1} parent=55 // pred_fallthru
          _
        // Predicated region
        $region73: #{tpu_custom_call.1} parent=55 // pred_check
          %p453 = pneg %p192
        $region74: #{tpu_custom_call.1} parent=55 // pred_check_branch
          %455 = sbr.rel (%p453) target = $region76
        $region75: #{tpu_custom_call.1} parent=55 // pred_region
          %456 = dma.done [#allocation11], 1024
        $region76: #{tpu_custom_call.1} parent=55 // pred_fallthru
          _
        // Predicated region
        $region77: #{tpu_custom_call.1} parent=55 // pred_check
          %p457 = pneg %p234
        $region78: #{tpu_custom_call.1} parent=55 // pred_check_branch
          %459 = sbr.rel (%p457) target = $region80
        $region79: #{tpu_custom_call.1} parent=55 // pred_region
          %460 = dma.done [#allocation14], 512
        $region80: #{tpu_custom_call.1} parent=55 // pred_fallthru
          _
        %p461 = pneg %p65
        %p462 = pneg %p62
        %p463 = pneg %p91
        %p464 = pneg %p88
        %p465 = pneg %p117
        %p466 = pneg %p114
        %p467 = pneg %p143
        %p468 = pneg %p140
        %p469 = scmp.lt.s32.totalorder %s37, 6
        %s470 = scalar_select %p469, %s37, 6
        %p471 = scmp.lt.s32.totalorder %s36, 0
        %s472 = scalar_select %p471, %s36, 0
        %s473 = sadd.s32 %s472, %s470
        %s474 = smul.addr %s473, 2
        %s475 = scalar_lea.vmem %s4, %s474
        %p476 = pneg %p171
        %p477 = pneg %p168
        %p478 = pneg %p192
        %p479 = pneg %p189
        %p480 = pneg %p213
        %p481 = pneg %p210
        %p482 = pneg %p234
        %p483 = pneg %p231
        %p484 = pneg %p255
        %p485 = pneg %p252
        %p486 = pneg %p283
        %p487 = pneg %p280
        %s488 = sand.u32 %s270, 1
        %s489 = scalar_lea.sflag [#allocation6], %s488
        %s490 = sand.u32 %s270, 1
        %s491 = smul.addr %s490, 2
        %s492 = scalar_lea.vmem [#allocation15], %s491
        %p493 = pneg %p311
        %p494 = pneg %p308
        %s495 = sand.u32 %s298, 1
        %s496 = scalar_lea.sflag [#allocation17], %s495
        %s497 = sand.u32 %s298, 1
        %s498 = smul.addr %s497, 2
        %s499 = scalar_lea.vmem [#allocation16], %s498
        %s500 = smul.u32 2, %s36
        %s501 = smul.u32 2, %s36
        %p502 = scmp.lt.s32.totalorder %s37, 6
        %s503 = scalar_select %p502, %s37, 6
        %p504 = scmp.lt.s32.totalorder %s36, 0
        %s505 = scalar_select %p504, %s36, 0
        %s506 = sadd.s32 %s505, %s503
        %s507 = smul.addr %s506, 2
        %s508 = scalar_lea.vmem %s4, %s507
        %p509 = scmp.eq.s32.totalorder %s37, 0
        // Predicated region
        $region81: #{tpu_custom_call.1} parent=55 // pred_check
          %p510 = pneg %p509
        $region82: #{tpu_custom_call.1} parent=55 // pred_check_branch
          %512 = sbr.rel (%p510) target = $region84
        $region83: #{tpu_custom_call.1} parent=55 // pred_region
          %v513 = vld [vmem:[#allocation9] sm:$0x3]
          %vm514 = vcmask 254976
          %515 = vst.msk [vmem:[#allocation2] sm:$0x3] %vm514, %v513
          %v516 = vld [vmem:[#allocation10] sm:$0x3]
          %517 = vst.msk [vmem:[#allocation3] sm:$0x3] %vm514, %v516
        $region84: #{tpu_custom_call.1} parent=55 // pred_fallthru
          _
        %v518 = vld [vmem:[#allocation2] sm:$0x3]
        %v519 = vld [vmem:[#allocation3] sm:$0x3]
        %v520 = vld [vmem:[#allocation12] sm:$0xff]
        %v521 = vld [vmem:[#allocation12 + $0x8] sm:$0xff]
        %v522 = vld [vmem:[#allocation12 + $0x10] sm:$0xff]
        %v523 = vld [vmem:[#allocation12 + $0x18] sm:$0xff]
        %v524 = vld [vmem:[#allocation12 + $0x20] sm:$0xff]
        %v525 = vld [vmem:[#allocation12 + $0x28] sm:$0xff]
        %v526 = vld [vmem:[#allocation12 + $0x30] sm:$0xff]
        %v527 = vld [vmem:[#allocation12 + $0x38] sm:$0xff]
        %v528 = vld [vmem:[%s6] sm:$0x3]
        %v530 = vlaneseq
        %v531 = vshrl.u32 %v530, 7
        %v532 = vsub.s32 0, %v531
        %v533 = vrot.slane %v528, %v532
        %v534 = vlaneseq
        %v535 = vshrl.u32 %v534, 7
        %v536 = vsub.s32 1, %v535
        %v537 = vrot.slane %v528, %v536
        %vm540 = vcmask 261120
        %v542 = vsel %vm540, %v518, 0
        %544 = vmatprep.subr.mxu0 %v521
        %545 = vmatpush1.msra.mxu0 %v520
        %546 = vmatprep.subr.mxu0 %v523
        %547 = vmatpush1.msra.mxu0 %v522
        %548 = vmatprep.subr.mxu0 %v525
        %549 = vmatpush1.msra.mxu0 %v524
        %550 = vmatprep.subr.mxu0 %v527
        %551 = vmatpush1.msra.mxu0 %v526
        %552 = vmatprep.subr.mxu0 0.0
        %553 = vmatpush1.msra.mxu0 0.0
        %554 = vmatprep.subr.mxu0 0.0
        %555 = vmatpush1.msra.mxu0 0.0
        %556 = vmatprep.subr.mxu0 0.0
        %557 = vmatpush1.msra.mxu0 0.0
        %558 = vmatprep.subr.mxu0 0.0
        %559 = vmatpush1.msra.mxu0 0.0
        %560 = vmatprep.subr.mxu0 0.0
        %561 = vmatpush1.msra.mxu0 0.0
        %562 = vmatprep.subr.mxu0 0.0
        %563 = vmatpush1.msra.mxu0 0.0
        %564 = vmatprep.subr.mxu0 0.0
        %565 = vmatpush1.msra.mxu0 0.0
        %566 = vmatprep.subr.mxu0 0.0
        %567 = vmatpush1.msra.mxu0 0.0
        %568 = vmatprep.subr.mxu0 0.0
        %569 = vmatpush1.msra.mxu0 0.0
        %570 = vmatprep.subr.mxu0 0.0
        %571 = vmatpush1.msra.mxu0 0.0
        %572 = vmatprep.subr.mxu0 0.0
        %573 = vmatpush1.msra.mxu0 0.0
        %574 = vmatprep.subr.mxu0 0.0
        %575 = vmatpush1.msra.mxu0 0.0
        %576 = vmatprep.subr.mxu0 0.0
        %577 = vmatpush1.msra.mxu0 0.0
        %578 = vmatprep.subr.mxu0 0.0
        %579 = vmatpush1.msra.mxu0 0.0
        %580 = vmatprep.subr.mxu0 0.0
        %581 = vmatpush1.msra.mxu0 0.0
        %582 = vmatprep.subr.mxu0 0.0
        %583 = vmatpush1.msra.mxu0 0.0
        %584 = vmatprep.subr.mxu0 0.0
        %585 = vmatpush1.msra.mxu0 0.0
        %586 = vmatprep.subr.mxu0 0.0
        %587 = vmatpush1.msra.mxu0 0.0
        %588 = vmatprep.subr.mxu0 0.0
        %589 = vmatpush1.msra.mxu0 0.0
        %590 = vmatprep.subr.mxu0 0.0
        %591 = vmatpush1.msra.mxu0 0.0
        %592 = vmatprep.subr.mxu0 0.0
        %593 = vmatpush1.msra.mxu0 0.0
        %594 = vmatprep.subr.mxu0 0.0
        %595 = vmatpush1.msra.mxu0 0.0
        %596 = vmatprep.subr.mxu0 0.0
        %597 = vmatpush1.msra.mxu0 0.0
        %598 = vmatprep.subr.mxu0 0.0
        %599 = vmatpush1.msra.mxu0 0.0
        %600 = vmatprep.subr.mxu0 0.0
        %601 = vmatpush1.msra.mxu0 0.0
        %602 = vmatprep.subr.mxu0 0.0
        %603 = vmatpush1.msra.mxu0 0.0
        %604 = vmatprep.subr.mxu0 0.0
        %605 = vmatpush1.msra.mxu0 0.0
        %606 = vmatprep.subr.mxu0 0.0
        %607 = vmatpush1.msra.mxu0 0.0
        %608 = vmatprep.mubr.f32.mxu0 0.0
        %609 = vmatmul.mubr.f32.gmra.mrb[0].mxu0 %v542
        %v610 = vpop.f32.mrb[0].mxu0
        %v611 = vadd.f32 %v533, %v610
        %v612 = vpop.f32.mrb[0].mxu0
        %v613 = vadd.f32 %v537, %v612
        %614 = vdwg.mxu0
        %v615 = vxor.u32 %v611, 2147483648
        %v616 = vmul.f32 %v615, 1.442695
        %v617 = vpow.pop %v616
        %v618 = vadd.f32 %v617, 1.0
        %v619 = vrcp.pop %v618
        %v620 = vmul.f32 1.0, %v619
        %v621 = vld [vmem:[#allocation7] sm:$0xff]
        %v622 = vld [vmem:[#allocation7 + $0x8] sm:$0xff]
        %v625 = vunpack.c.l.s4 1966171168
        %v626 = vunpack.c.0.s8 %v625
        %v627 = vlaneseq
        %v628 = vshrl.u32 %v627, 7
        %v629 = vsub.s32 %v626, %v628
        %v630 = vrot.slane %v611, %v629
        %v631 = vcombine.high %v630, %v630
        %v633 = vunpack.c.l.s4 1966171168
        %v634 = vunpack.c.0.s8 %v633
        %v635 = vlaneseq
        %v636 = vshrl.u32 %v635, 7
        %v637 = vsub.s32 %v634, %v636
        %v638 = vrot.slane %v630, %v637
        %v640 = vunpack.c.l.s4 1966171168
        %v641 = vunpack.c.0.s8 %v640
        %v642 = vlaneseq
        %v643 = vshrl.u32 %v642, 7
        %v644 = vsub.s32 %v641, %v643
        %v645 = vrot.slane %v631, %v644
        %v646 = vlaneseq
        %v647 = vshrl.u32 %v646, 7
        %v648 = vsub.s32 0, %v647
        %v649 = vrot.slane %v638, %v648
        %v650 = vlaneseq
        %v651 = vshrl.u32 %v650, 7
        %v652 = vsub.s32 0, %v651
        %v653 = vrot.slane %v645, %v652
        %v656 = vadd.f32 %v621, %v649
        %v657 = vadd.f32 %v622, %v653
        %v658 = vtanh.pop %v656
        %v659 = vtanh.pop %v657
        %v660 = vld [vmem:[%s8] sm:$0x1]
        %v662 = vlaneseq
        %v663 = vshrl.u32 %v662, 7
        %v664 = vsub.s32 0, %v663
        %v665 = vrot.slane %v660, %v664
        %v667 = vmul.f32 %v658, %v665
        %v668 = vmul.f32 %v659, %v665
        %vm669 = vcmask 130048
        %v670 = vsel %vm669, %v667, 0.0
        %671 = vadd.xlane.f32.xlu0 %v670
        %v672 = vpop.xlane.xlu0 %671
        %v673 = vsel %vm669, %v668, 0.0
        %674 = vadd.xlane.f32.xlu0 %v673
        %v675 = vpop.xlane.xlu0 %674
        %v678 = vlaneseq
        %v679 = vand.u32 %v678, 127
        %v680 = vlaneseq
        %v681 = vshrl.u32 %v680, 7
        %v682 = vsub.s32 %v679, %v681
        %v683 = vrot.slane %v672, %v682
        %v684 = vlaneseq
        %v685 = vshrl.u32 %v684, 7
        %v686 = vsub.s32 %v679, %v685
        %v687 = vrot.slane %v675, %v686
        %vm688 = vcmask 1041409
        %v689 = vsel %vm688, %v687, %v683
        %vm691 = vcmask 58368
        %v692 = vsel %vm691, %v689, -inf
        %693 = vmax.xlane.f32.xlu0 %v692
        %v694 = vpop.xlane.xlu0 %693
        %v696 = vlaneseq
        %v697 = vshrl.u32 %v696, 7
        %v698 = vsub.s32 0, %v697
        %v699 = vrot.slane %v694, %v698
        %v700 = vlaneseq
        %v701 = vshrl.u32 %v700, 7
        %v702 = vsub.s32 1, %v701
        %v703 = vrot.slane %v694, %v702
        %v706 = vsub.f32 %v672, %v699
        %v707 = vsub.f32 %v675, %v703
        %v708 = vmul.f32 %v706, 1.442695
        %v709 = vpow.pop %v708
        %v710 = vmul.f32 %v707, 1.442695
        %v711 = vpow.pop %v710
        %714 = vset.pattern.permute.xlu0 0
        %715 = vperm.xlu0 %714, %v709
        %v716 = vpop.permute.xlu0 %715
        %717 = vset.pattern.permute.xlu0 0
        %718 = vperm.xlu0 %717, %v711
        %v719 = vpop.permute.xlu0 %718
        %v720 = vlaneseq
        %v721 = vshrl.u32 %v720, 7
        %v722 = vsub.s32 %v679, %v721
        %v723 = vrot.slane %v716, %v722
        %v724 = vlaneseq
        %v725 = vshrl.u32 %v724, 7
        %v726 = vsub.s32 %v679, %v725
        %v727 = vrot.slane %v719, %v726
        %v728 = vsel %vm688, %v727, %v723
        %v730 = vsel %vm691, %v728, 0.0
        %731 = vadd.xlane.f32.xlu0 %v730
        %v732 = vpop.xlane.xlu0 %731
        %v733 = vrcp.pop %v732
        %v735 = vlaneseq
        %v736 = vshrl.u32 %v735, 7
        %v737 = vsub.s32 0, %v736
        %v738 = vrot.slane %v733, %v737
        %v739 = vlaneseq
        %v740 = vshrl.u32 %v739, 7
        %v741 = vsub.s32 1, %v740
        %v742 = vrot.slane %v733, %v741
        %v745 = vmul.f32 %v709, %v738
        %v746 = vmul.f32 %v711, %v742
        %v747 = vld [vmem:[#allocation4] sm:$0xff]
        %v748 = vld [vmem:[#allocation4 + $0x8] sm:$0xff]
        %750 = vset.pattern.permute.xlu0 0
        %751 = vperm.xlu0 %750, %v745
        %v752 = vpop.permute.xlu0 %751
        %v753 = vlaneseq
        %v754 = vshrl.u32 %v753, 7
        %v755 = vsub.s32 %v679, %v754
        %v756 = vrot.slane %v752, %v755
        %vm757 = vcmask 64512
        %v758 = vsel %vm757, %v756, 0
        %760 = vmatprep.subr.mxu0 0.0
        %761 = vmatpush1.msra.mxu0 %v747
        %762 = vmatprep.subr.mxu0 0.0
        %763 = vmatpush1.msra.mxu0 0.0
        %764 = vmatprep.subr.mxu0 0.0
        %765 = vmatpush1.msra.mxu0 0.0
        %766 = vmatprep.subr.mxu0 0.0
        %767 = vmatpush1.msra.mxu0 0.0
        %768 = vmatprep.subr.mxu0 0.0
        %769 = vmatpush1.msra.mxu0 0.0
        %770 = vmatprep.subr.mxu0 0.0
        %771 = vmatpush1.msra.mxu0 0.0
        %772 = vmatprep.subr.mxu0 0.0
        %773 = vmatpush1.msra.mxu0 0.0
        %774 = vmatprep.subr.mxu0 0.0
        %775 = vmatpush1.msra.mxu0 0.0
        %776 = vmatprep.subr.mxu0 0.0
        %777 = vmatpush1.msra.mxu0 0.0
        %778 = vmatprep.subr.mxu0 0.0
        %779 = vmatpush1.msra.mxu0 0.0
        %780 = vmatprep.subr.mxu0 0.0
        %781 = vmatpush1.msra.mxu0 0.0
        %782 = vmatprep.subr.mxu0 0.0
        %783 = vmatpush1.msra.mxu0 0.0
        %784 = vmatprep.subr.mxu0 0.0
        %785 = vmatpush1.msra.mxu0 0.0
        %786 = vmatprep.subr.mxu0 0.0
        %787 = vmatpush1.msra.mxu0 0.0
        %788 = vmatprep.subr.mxu0 0.0
        %789 = vmatpush1.msra.mxu0 0.0
        %790 = vmatprep.subr.mxu0 0.0
        %791 = vmatpush1.msra.mxu0 0.0
        %792 = vmatprep.subr.mxu0 0.0
        %793 = vmatpush1.msra.mxu0 0.0
        %794 = vmatprep.subr.mxu0 0.0
        %795 = vmatpush1.msra.mxu0 0.0
        %796 = vmatprep.subr.mxu0 0.0
        %797 = vmatpush1.msra.mxu0 0.0
        %798 = vmatprep.subr.mxu0 0.0
        %799 = vmatpush1.msra.mxu0 0.0
        %800 = vmatprep.subr.mxu0 0.0
        %801 = vmatpush1.msra.mxu0 0.0
        %802 = vmatprep.subr.mxu0 0.0
        %803 = vmatpush1.msra.mxu0 0.0
        %804 = vmatprep.subr.mxu0 0.0
        %805 = vmatpush1.msra.mxu0 0.0
        %806 = vmatprep.subr.mxu0 0.0
        %807 = vmatpush1.msra.mxu0 0.0
        %808 = vmatprep.subr.mxu0 0.0
        %809 = vmatpush1.msra.mxu0 0.0
        %810 = vmatprep.subr.mxu0 0.0
        %811 = vmatpush1.msra.mxu0 0.0
        %812 = vmatprep.subr.mxu0 0.0
        %813 = vmatpush1.msra.mxu0 0.0
        %814 = vmatprep.subr.mxu0 0.0
        %815 = vmatpush1.msra.mxu0 0.0
        %816 = vmatprep.subr.mxu0 0.0
        %817 = vmatpush1.msra.mxu0 0.0
        %818 = vmatprep.subr.mxu0 0.0
        %819 = vmatpush1.msra.mxu0 0.0
        %820 = vmatprep.subr.mxu0 0.0
        %821 = vmatpush1.msra.mxu0 0.0
        %822 = vmatprep.subr.mxu0 0.0
        %823 = vmatpush1.msra.mxu0 0.0
        %824 = vmatprep.mubr.f32.mxu0 0.0
        %825 = vmatmul.mubr.f32.gmra.mrb[0].mxu0 %v758
        %v826 = vpop.f32.mrb[0].mxu0
        %v827 = vadd.f32 0.0, %v826
        %v828 = vpop.f32.mrb[0].mxu0
        %829 = vdwg.mxu0
        %831 = vset.pattern.permute.xlu0 0
        %832 = vperm.xlu0 %831, %v746
        %v833 = vpop.permute.xlu0 %832
        %v834 = vlaneseq
        %v835 = vshrl.u32 %v834, 7
        %v836 = vsub.s32 %v679, %v835
        %v837 = vrot.slane %v833, %v836
        %v838 = vsel %vm757, %v837, 0
        %840 = vmatprep.subr.mxu0 0.0
        %841 = vmatpush1.msra.mxu0 %v748
        %842 = vmatprep.subr.mxu0 0.0
        %843 = vmatpush1.msra.mxu0 0.0
        %844 = vmatprep.subr.mxu0 0.0
        %845 = vmatpush1.msra.mxu0 0.0
        %846 = vmatprep.subr.mxu0 0.0
        %847 = vmatpush1.msra.mxu0 0.0
        %848 = vmatprep.subr.mxu0 0.0
        %849 = vmatpush1.msra.mxu0 0.0
        %850 = vmatprep.subr.mxu0 0.0
        %851 = vmatpush1.msra.mxu0 0.0
        %852 = vmatprep.subr.mxu0 0.0
        %853 = vmatpush1.msra.mxu0 0.0
        %854 = vmatprep.subr.mxu0 0.0
        %855 = vmatpush1.msra.mxu0 0.0
        %856 = vmatprep.subr.mxu0 0.0
        %857 = vmatpush1.msra.mxu0 0.0
        %858 = vmatprep.subr.mxu0 0.0
        %859 = vmatpush1.msra.mxu0 0.0
        %860 = vmatprep.subr.mxu0 0.0
        %861 = vmatpush1.msra.mxu0 0.0
        %862 = vmatprep.subr.mxu0 0.0
        %863 = vmatpush1.msra.mxu0 0.0
        %864 = vmatprep.subr.mxu0 0.0
        %865 = vmatpush1.msra.mxu0 0.0
        %866 = vmatprep.subr.mxu0 0.0
        %867 = vmatpush1.msra.mxu0 0.0
        %868 = vmatprep.subr.mxu0 0.0
        %869 = vmatpush1.msra.mxu0 0.0
        %870 = vmatprep.subr.mxu0 0.0
        %871 = vmatpush1.msra.mxu0 0.0
        %872 = vmatprep.subr.mxu0 0.0
        %873 = vmatpush1.msra.mxu0 0.0
        %874 = vmatprep.subr.mxu0 0.0
        %875 = vmatpush1.msra.mxu0 0.0
        %876 = vmatprep.subr.mxu0 0.0
        %877 = vmatpush1.msra.mxu0 0.0
        %878 = vmatprep.subr.mxu0 0.0
        %879 = vmatpush1.msra.mxu0 0.0
        %880 = vmatprep.subr.mxu0 0.0
        %881 = vmatpush1.msra.mxu0 0.0
        %882 = vmatprep.subr.mxu0 0.0
        %883 = vmatpush1.msra.mxu0 0.0
        %884 = vmatprep.subr.mxu0 0.0
        %885 = vmatpush1.msra.mxu0 0.0
        %886 = vmatprep.subr.mxu0 0.0
        %887 = vmatpush1.msra.mxu0 0.0
        %888 = vmatprep.subr.mxu0 0.0
        %889 = vmatpush1.msra.mxu0 0.0
        %890 = vmatprep.subr.mxu0 0.0
        %891 = vmatpush1.msra.mxu0 0.0
        %892 = vmatprep.subr.mxu0 0.0
        %893 = vmatpush1.msra.mxu0 0.0
        %894 = vmatprep.subr.mxu0 0.0
        %895 = vmatpush1.msra.mxu0 0.0
        %896 = vmatprep.subr.mxu0 0.0
        %897 = vmatpush1.msra.mxu0 0.0
        %898 = vmatprep.subr.mxu0 0.0
        %899 = vmatpush1.msra.mxu0 0.0
        %900 = vmatprep.subr.mxu0 0.0
        %901 = vmatpush1.msra.mxu0 0.0
        %902 = vmatprep.subr.mxu0 0.0
        %903 = vmatpush1.msra.mxu0 0.0
        %904 = vmatprep.mubr.f32.mxu0 0.0
        %905 = vmatmul.mubr.f32.gmra.mrb[0].mxu0 %v838
        %v906 = vpop.f32.mrb[0].mxu0
        %v907 = vadd.f32 0.0, %v906
        %v908 = vpop.f32.mrb[0].mxu0
        %909 = vdwg.mxu0
        %v912 = vrot.slane %v907, 7
        %v913 = vsel %vm688, %v912, %v827
        %914 = vrot.lane.b32.xlu0 %v913, 16
        %v915 = vpop.permute.xlu0 %914
        %v917 = vmul.f32 %v620, %v915
        %v918 = vld [vmem:[%s508] sm:$0x3]
        %920 = vrot.lane.b32.xlu0 %v611, 80
        %v921 = vpop.permute.xlu0 %920
        %922 = vrot.lane.b32.xlu0 %v613, 80
        %v923 = vpop.permute.xlu0 %922
        %vm924 = vcmask 654336
        %v925 = vsel %vm924, %v921, %v923
        %v927 = vadd.f32 %v918, %v925
        %v928 = vld [vmem:[#allocation13] sm:$0xff]
        %v929 = vld [vmem:[#allocation13 + $0x8] sm:$0xff]
        %v930 = vld [vmem:[#allocation13 + $0x10] sm:$0xff]
        %v931 = vld [vmem:[#allocation13 + $0x18] sm:$0xff]
        %933 = vrot.lane.b32.xlu0 %v917, 112
        %v934 = vpop.permute.xlu0 %933
        %v935 = vsel %vm540, %v934, 0
        %937 = vmatprep.subr.mxu0 0.0
        %938 = vmatpush1.msra.mxu0 %v928
        %939 = vmatprep.subr.mxu0 0.0
        %940 = vmatpush1.msra.mxu0 %v929
        %941 = vmatprep.subr.mxu0 0.0
        %942 = vmatpush1.msra.mxu0 %v930
        %943 = vmatprep.subr.mxu0 0.0
        %944 = vmatpush1.msra.mxu0 %v931
        %945 = vmatprep.subr.mxu0 0.0
        %946 = vmatpush1.msra.mxu0 0.0
        %947 = vmatprep.subr.mxu0 0.0
        %948 = vmatpush1.msra.mxu0 0.0
        %949 = vmatprep.subr.mxu0 0.0
        %950 = vmatpush1.msra.mxu0 0.0
        %951 = vmatprep.subr.mxu0 0.0
        %952 = vmatpush1.msra.mxu0 0.0
        %953 = vmatprep.subr.mxu0 0.0
        %954 = vmatpush1.msra.mxu0 0.0
        %955 = vmatprep.subr.mxu0 0.0
        %956 = vmatpush1.msra.mxu0 0.0
        %957 = vmatprep.subr.mxu0 0.0
        %958 = vmatpush1.msra.mxu0 0.0
        %959 = vmatprep.subr.mxu0 0.0
        %960 = vmatpush1.msra.mxu0 0.0
        %961 = vmatprep.subr.mxu0 0.0
        %962 = vmatpush1.msra.mxu0 0.0
        %963 = vmatprep.subr.mxu0 0.0
        %964 = vmatpush1.msra.mxu0 0.0
        %965 = vmatprep.subr.mxu0 0.0
        %966 = vmatpush1.msra.mxu0 0.0
        %967 = vmatprep.subr.mxu0 0.0
        %968 = vmatpush1.msra.mxu0 0.0
        %969 = vmatprep.subr.mxu0 0.0
        %970 = vmatpush1.msra.mxu0 0.0
        %971 = vmatprep.subr.mxu0 0.0
        %972 = vmatpush1.msra.mxu0 0.0
        %973 = vmatprep.subr.mxu0 0.0
        %974 = vmatpush1.msra.mxu0 0.0
        %975 = vmatprep.subr.mxu0 0.0
        %976 = vmatpush1.msra.mxu0 0.0
        %977 = vmatprep.subr.mxu0 0.0
        %978 = vmatpush1.msra.mxu0 0.0
        %979 = vmatprep.subr.mxu0 0.0
        %980 = vmatpush1.msra.mxu0 0.0
        %981 = vmatprep.subr.mxu0 0.0
        %982 = vmatpush1.msra.mxu0 0.0
        %983 = vmatprep.subr.mxu0 0.0
        %984 = vmatpush1.msra.mxu0 0.0
        %985 = vmatprep.subr.mxu0 0.0
        %986 = vmatpush1.msra.mxu0 0.0
        %987 = vmatprep.subr.mxu0 0.0
        %988 = vmatpush1.msra.mxu0 0.0
        %989 = vmatprep.subr.mxu0 0.0
        %990 = vmatpush1.msra.mxu0 0.0
        %991 = vmatprep.subr.mxu0 0.0
        %992 = vmatpush1.msra.mxu0 0.0
        %993 = vmatprep.subr.mxu0 0.0
        %994 = vmatpush1.msra.mxu0 0.0
        %995 = vmatprep.subr.mxu0 0.0
        %996 = vmatpush1.msra.mxu0 0.0
        %997 = vmatprep.subr.mxu0 0.0
        %998 = vmatpush1.msra.mxu0 0.0
        %999 = vmatprep.subr.mxu0 0.0
        %1000 = vmatpush1.msra.mxu0 0.0
        %1001 = vmatprep.mubr.f32.mxu0 0.0
        %1002 = vmatmul.mubr.f32.gmra.mrb[0].mxu0 %v935
        %v1003 = vpop.f32.mrb[0].mxu0
        %v1004 = vadd.f32 0.0, %v1003
        %v1005 = vpop.f32.mrb[0].mxu0
        %1006 = vdwg.mxu0
        %v1007 = vadd.f32 %v927, %v1004
        %v1008 = vxor.u32 %v1007, 2147483648
        %v1009 = vmul.f32 %v1008, 1.442695
        %v1010 = vpow.pop %v1009
        %v1011 = vadd.f32 %v1010, 1.0
        %v1012 = vrcp.pop %v1011
        %v1013 = vmul.f32 1.0, %v1012
        %v1014 = vtanh.pop %v1007
        %1016 = vrot.lane.b32.xlu0 %v519, 32
        %v1017 = vpop.permute.xlu0 %1016
        %v1019 = vmul.f32 %v1013, %v1017
        %1021 = vrot.lane.b32.xlu0 %v1014, 64
        %v1022 = vpop.permute.xlu0 %1021
        %v1024 = vmul.f32 %v1013, %v1022
        %1026 = vrot.lane.b32.xlu0 %v1024, 32
        %v1027 = vpop.permute.xlu0 %1026
        %v1029 = vadd.f32 %v1019, %v1027
        %v1030 = vtanh.pop %v1029
        %1032 = vrot.lane.b32.xlu0 %v1030, 64
        %v1033 = vpop.permute.xlu0 %1032
        %v1035 = vmul.f32 %v1013, %v1033
        %1037 = vrot.lane.b32.xlu0 %v1035, 32
        %v1038 = vpop.permute.xlu0 %1037
        %vm1040 = vcmask 254976
        %1041 = vst.msk [vmem:[#allocation2] sm:$0x3] %vm1040, %v1038
        %1043 = vrot.lane.b32.xlu0 %v1029, 96
        %v1044 = vpop.permute.xlu0 %1043
        %1046 = vst.msk [vmem:[#allocation3] sm:$0x3] %vm1040, %v1044
        %1047 = vst.msk [vmem:[%s492] sm:$0x3] %vm1040, %v1038
        %v1048 = vsel %vm688, %v837, %v756
        %1050 = vst.msk [vmem:[%s499] sm:$0x3] %vm691, %v1048
        %s1051 = sand.u32 %s270, 1
        %s1052 = scalar_lea.sflag [#allocation6], %s1051
        %s1053 = sand.u32 %s270, 1
        %s1054 = smul.addr %s1053, 2
        %s1055 = scalar_lea.vmem [#allocation15], %s1054
        %s1056 = sand.u32 %s298, 1
        %s1057 = scalar_lea.sflag [#allocation17], %s1056
        %s1058 = sand.u32 %s298, 1
        %s1059 = smul.addr %s1058, 2
        %s1060 = scalar_lea.vmem [#allocation16], %s1059
        // Predicated region
        $region85: #{tpu_custom_call.1} parent=55 // pred_check
          %p1061 = pneg %p280
        $region86: #{tpu_custom_call.1} parent=55 // pred_check_branch
          %1063 = sbr.rel (%p1061) target = $region88
        $region87: #{tpu_custom_call.1} parent=55 // pred_region
          %s1065 = ssub.s32 32, 32
          %1066 = vsyncadd %s1052, %s1065
          %s1067 = sadd.s32 %s36, %s37
          %s1068 = smul.addr %s1067, 32
          %s1069 = scalar_lea.hbm %s9, %s1068
          %s1071 = sshll.u32 %s1055, 4
          %s1072 = int_to_ptr.vmem [resolvable:$true] %s1071
          %1074 = dma.vmem_to_hbm [thread:$0]  %s1072, 32, %s1069, %s1052
        $region88: #{tpu_custom_call.1} parent=55 // pred_fallthru
          _
        // Predicated region
        $region89: #{tpu_custom_call.1} parent=55 // pred_check
          %p1075 = pneg %p308
        $region90: #{tpu_custom_call.1} parent=55 // pred_check_branch
          %1077 = sbr.rel (%p1075) target = $region92
        $region91: #{tpu_custom_call.1} parent=55 // pred_region
          %s1079 = ssub.s32 32, 32
          %1080 = vsyncadd %s1057, %s1079
          %s1081 = sadd.s32 %s36, %s37
          %s1082 = smul.addr %s1081, 32
          %s1083 = scalar_lea.hbm %s10, %s1082
          %s1085 = sshll.u32 %s1060, 4
          %s1086 = int_to_ptr.vmem [resolvable:$true] %s1085
          %1088 = dma.vmem_to_hbm [thread:$0]  %s1086, 32, %s1083, %s1057
        $region92: #{tpu_custom_call.1} parent=55 // pred_fallthru
          _
      $region56: #{tpu_custom_call.1} parent=5 // pred_fallthru
        _
      %p1089 = scmp.le.s32.totalorder 2, %s27
      // Predicated region
      $region93: #{tpu_custom_call.1} parent=5 // pred_check
        %p1090 = pneg %p1089
      $region94: #{tpu_custom_call.1} parent=5 // pred_check_branch
        %1092 = sbr.rel (%p1090) target = $region96
      $region95: #{tpu_custom_call.1} parent=5 // pred_region
        %s1093 = ssub.s32 %s27, 2
        // Predicated region
        $region97: #{tpu_custom_call.1} parent=95 // pred_check
          %p1094 = pneg %p286
        $region98: #{tpu_custom_call.1} parent=95 // pred_check_branch
          %1096 = sbr.rel (%p1094) target = $region100
        $region99: #{tpu_custom_call.1} parent=95 // pred_region
          %s1097 = sand.u32 %s271, 1
          %s1098 = scalar_lea.sflag [#allocation6], %s1097
          %s1099 = sand.u32 %s271, 1
          %s1100 = smul.addr %s1099, 2
          %s1101 = scalar_lea.vmem [#allocation15], %s1100
          %1102 = dma.done %s1098, 32
        $region100: #{tpu_custom_call.1} parent=95 // pred_fallthru
          _
        // Predicated region
        $region101: #{tpu_custom_call.1} parent=95 // pred_check
          %p1103 = pneg %p314
        $region102: #{tpu_custom_call.1} parent=95 // pred_check_branch
          %1105 = sbr.rel (%p1103) target = $region104
        $region103: #{tpu_custom_call.1} parent=95 // pred_region
          %s1106 = sand.u32 %s299, 1
          %s1107 = scalar_lea.sflag [#allocation17], %s1106
          %s1108 = sand.u32 %s299, 1
          %s1109 = smul.addr %s1108, 2
          %s1110 = scalar_lea.vmem [#allocation16], %s1109
          %1111 = dma.done %s1107, 32
        $region104: #{tpu_custom_call.1} parent=95 // pred_fallthru
          _
      $region96: #{tpu_custom_call.1} parent=5 // pred_fallthru
        _
    $region6: #{tpu_custom_call.1} parent=1 // loop_footer
      %s31 = sadd.s32 1, %s27
    $region7: #{tpu_custom_call.1} parent=1 // loop_footer_branch
      %26 = sbr.rel target = $region3
    $region8: #{tpu_custom_call.1} parent=1 // loop_exit
      _
    %1112 = vsyncpa [#allocation5], 1
    %s1113 = scalar_lea.sflag [#allocation5], 1
    %1114 = vsyncpa %s1113, 1
    %1115 = vsyncpa [#allocation8], 1
    %1116 = vsyncpa [#allocation11], 1
    %1117 = vsyncpa [#allocation14], 1
    %1118 = vsyncpa [#allocation6], 1
    %s1119 = scalar_lea.sflag [#allocation6], 1
    %1120 = vsyncpa %s1119, 1
    %1121 = vsyncpa [#allocation17], 1
    %s1122 = scalar_lea.sflag [#allocation17], 1
    %1123 = vsyncpa %s1122, 1

</llo_original>
